<compile_context>
chip_gen: v7x
topology: tpu7x:2x2x1
jax: 0.10.0
libtpu: 0.0.40
codegen_flags: <defaults>
</compile_context>

<pallas_src>
import functools

import jax
import jax.numpy as jnp
from jax.experimental import pallas as pl
from jax.experimental.pallas import tpu as pltpu


def gate_kernel(x_ref, w_ref, b_ref, o_ref, *, n):
    np_lanes = o_ref.shape[-1]  # G * n == 128 (lane-dense)

    # Packed Linear on the MXU: (tm, G*16) @ (G*16, G*n) + (1, G*n).
    z = jnp.dot(x_ref[...], w_ref[...], preferred_element_type=jnp.float32)
    z = z + b_ref[...]

    # Per-segment softmax (segment = n consecutive lanes = one original row).
    lane = jax.lax.broadcasted_iota(jnp.int32, (1, np_lanes), 1)
    shifts = []
    s = 1
    while s < n:
        shifts.append(s)
        s *= 2
    # For each shift, does pltpu.roll(., +s) deliver the lane^s partner (vs the
    # 128-s roll)?  Derived by rolling the lane iota with the same op, so the
    # selection is immune to the roll sign convention.
    take_pos = {s: pltpu.roll(lane, s, axis=1) == (lane ^ s) for s in shifts}

    def xor_partner(v, s):
        return jnp.where(take_pos[s],
                         pltpu.roll(v, s, axis=1),
                         pltpu.roll(v, np_lanes - s, axis=1))

    # Exact per-segment max (XOR butterfly; partners never cross segments).
    m = z
    for s in shifts:
        m = jnp.maximum(m, xor_partner(m, s))
    e = jnp.exp(z - m)
    # Exact per-segment sum (same butterfly, disjoint coverage at every step).
    d = e
    for s in shifts:
        d = d + xor_partner(d, s)
    # d >= 1 (the max element contributes exp(0)); exact reciprocal keeps 1e-5.
    o_ref[...] = (e * pl.reciprocal(d, approx=False)).astype(o_ref.dtype)


def gate_forward(x, w, b, *, tm_max=1024, min_grid_steps=4):
    """x: (B, 16) f32, w: (16, n) f32 (== W_pt.T), b: (1, n) f32 -> (B, 1, n)."""
    B, K = x.shape
    n = w.shape[1]
    if 128 % n != 0:
        raise NotImplementedError("gate_forward requires n to divide 128")
    G = 128 // n              # original rows packed per 128-lane group
    Kp, Np = G * K, G * n     # packed K (e.g. 256) and lane-dense N (128)

    # Pad batch to a multiple of G (so every packed row is fully valid) and to at
    # least 8 packed rows (full (8,128) tiles / M>=8 matmul).  Zero rows give
    # finite softmax values and are sliced off below.
    Bp = max(8 * G, ((B + G - 1) // G) * G)
    if Bp != B:
        x = jnp.pad(x, ((0, Bp - B), (0, 0)))
    R = Bp // G

    # Free row-major re-interpretation of x; one-time parameter prep.
    x_packed = x.reshape(R, Kp)
    w_blk = jnp.kron(jnp.eye(G, dtype=w.dtype), w)                         # (Kp, Np)
    b_blk = jnp.tile(jnp.reshape(b, (1, n)).astype(jnp.float32), (1, G))   # (1, Np)

    # Packed-row tile: multiple of 8, >= min_grid_steps pipeline steps when the
    # batch allows it, capped so double-buffered x+out (+ temporaries) stays well
    # inside the scoped VMEM default (raise tm_max with vmem_limit_bytes if needed).
    tm = min(tm_max, max(8, ((pl.cdiv(R, min_grid_steps) + 7) // 8) * 8))
    grid = (pl.cdiv(R, tm),)

    out = pl.pallas_call(
        functools.partial(gate_kernel, n=n),
        out_shape=jax.ShapeDtypeStruct((R, Np), jnp.float32),
        grid_spec=pltpu.PrefetchScalarGridSpec(
            num_scalar_prefetch=0,
            grid=grid,
            in_specs=[
                pl.BlockSpec((tm, Kp), lambda i: (i, 0)),   # packed activations
                pl.BlockSpec((Kp, Np), lambda i: (0, 0)),   # resident block-diag W
                pl.BlockSpec((1, Np), lambda i: (0, 0)),    # resident bias
            ],
            out_specs=pl.BlockSpec((tm, Np), lambda i: (i, 0)),  # lane-dense slab
        ),
        compiler_params=pltpu.CompilerParams(
            dimension_semantics=("parallel",),  # shard batch grid across TCs (v7x)
        ),
    )(x_packed, w_blk, b_blk)

    # Free reshape back (identical row-major layout); drop batch padding.
    return out.reshape(Bp, n)[:B].reshape(B, 1, n)


if __name__ == "__main__":
    IN_FEATURES = 16  # fixed by nn.Linear(16, n)
    N = 8             # gate width n
    B = 8             # batch

    key = jax.random.PRNGKey(0)
    kx, kw, kb, kx2 = jax.random.split(key, 4)

    # Deterministic params (mimics PyTorch Linear default: U(-1/sqrt(in), 1/sqrt(in)))
    bound = 1.0 / jnp.sqrt(jnp.float32(IN_FEATURES))
    w = jax.random.uniform(kw, (IN_FEATURES, N), jnp.float32, -bound, bound)  # = W_pt.T
    b = jax.random.uniform(kb, (1, N), jnp.float32, -bound, bound)

    # Primary small-shape run (exercises batch padding, single grid step).
    x = jax.random.normal(kx, (B, IN_FEATURES), jnp.float32)
    z = gate_forward(x, w, b)
    jax.block_until_ready(z)

    ref = jax.nn.softmax(x @ w + b, axis=1).reshape(B, 1, N)
    assert z.shape == (B, 1, N)
    assert jnp.allclose(z, ref, atol=1e-5, rtol=1e-5)
    assert jnp.allclose(jnp.sum(z, axis=-1), 1.0, atol=1e-5)

    # Secondary run: multi-step grid with a partial last packed tile and padding
    # (B=1000 -> 1008 padded rows -> 63 packed rows -> tile 16 -> 4 grid steps).
    B2 = 1000
    x2 = jax.random.normal(kx2, (B2, IN_FEATURES), jnp.float32)
    z2 = gate_forward(x2, w, b)
    jax.block_until_ready(z2)
    ref2 = jax.nn.softmax(x2 @ w + b, axis=1).reshape(B2, 1, N)
    assert z2.shape == (B2, 1, N)
    assert jnp.allclose(z2, ref2, atol=1e-5, rtol=1e-5)

    print("KERNEL_OK")
</pallas_src>

<mosaic_0001>
module attributes {stable_mosaic.version = 11 : i64} {
  func.func @gate_kernel(%arg0: i32, %arg1: memref<8x256xf32, #tpu.memory_space<vmem>>, %arg2: memref<256x128xf32, #tpu.memory_space<vmem>>, %arg3: memref<1x128xf32, #tpu.memory_space<vmem>>, %arg4: memref<8x128xf32, #tpu.memory_space<vmem>>) attributes {dimension_semantics = [#tpu.dimension_semantics<parallel>], iteration_bounds = array<i64: 1>, scalar_prefetch = 0 : i64, scratch_operands = 0 : i64, tpu.core_type = #tpu.core_type<tc>, window_params = [{transform_indices = @transform_0, window_bounds = array<i64: 8, 256>}, {pipeline_mode = #tpu.pipeline_mode<synchronous>, transform_indices = @transform_1, window_bounds = array<i64: 256, 128>}, {pipeline_mode = #tpu.pipeline_mode<synchronous>, transform_indices = @transform_2, window_bounds = array<i64: 1, 128>}, {transform_indices = @transform_3, window_bounds = array<i64: 8, 128>}]} {
    %c0 = arith.constant 0 : index
    %c0_0 = arith.constant 0 : index
    %0 = vector.load %arg1[%c0, %c0_0] : memref<8x256xf32, #tpu.memory_space<vmem>>, vector<8x256xf32>
    %c0_1 = arith.constant 0 : index
    %c0_2 = arith.constant 0 : index
    %1 = vector.load %arg2[%c0_1, %c0_2] : memref<256x128xf32, #tpu.memory_space<vmem>>, vector<256x128xf32>
    %cst = arith.constant dense<0.000000e+00> : vector<8x128xf32>
    %2 = tpu.matmul %0, %1, %cst {dimension_numbers = #tpu.dot_dimension_numbers<[1], [0], [0], [1], [0, 0, 1, 1], [], []>} : vector<8x256xf32>, vector<256x128xf32>, vector<8x128xf32> -> vector<8x128xf32>
    %c0_3 = arith.constant 0 : index
    %c0_4 = arith.constant 0 : index
    %3 = vector.load %arg3[%c0_3, %c0_4] : memref<1x128xf32, #tpu.memory_space<vmem>>, vector<1x128xf32>
    %4 = vector.broadcast %3 : vector<1x128xf32> to vector<8x128xf32>
    %5 = arith.addf %2, %4 : vector<8x128xf32>
    %6 = tpu.iota {dimensions = array<i32: 1>} : vector<1x128xi32>
    %c1_i32 = arith.constant 1 : i32
    %7 = tpu.dynamic_rotate %6 by %c1_i32 dim 1 : vector<1x128xi32>, i32 -> vector<1x128xi32>
    %c1_i32_5 = arith.constant 1 : i32
    %8 = vector.broadcast %c1_i32_5 : i32 to vector<1x128xi32>
    %9 = arith.xori %6, %8 : vector<1x128xi32>
    %10 = arith.cmpi eq, %7, %9 : vector<1x128xi32>
    %c2_i32 = arith.constant 2 : i32
    %11 = tpu.dynamic_rotate %6 by %c2_i32 dim 1 : vector<1x128xi32>, i32 -> vector<1x128xi32>
    %c2_i32_6 = arith.constant 2 : i32
    %12 = vector.broadcast %c2_i32_6 : i32 to vector<1x128xi32>
    %13 = arith.xori %6, %12 : vector<1x128xi32>
    %14 = arith.cmpi eq, %11, %13 : vector<1x128xi32>
    %c4_i32 = arith.constant 4 : i32
    %15 = tpu.dynamic_rotate %6 by %c4_i32 dim 1 : vector<1x128xi32>, i32 -> vector<1x128xi32>
    %c4_i32_7 = arith.constant 4 : i32
    %16 = vector.broadcast %c4_i32_7 : i32 to vector<1x128xi32>
    %17 = arith.xori %6, %16 : vector<1x128xi32>
    %18 = arith.cmpi eq, %15, %17 : vector<1x128xi32>
    %c1_i32_8 = arith.constant 1 : i32
    %19 = tpu.dynamic_rotate %5 by %c1_i32_8 dim 1 : vector<8x128xf32>, i32 -> vector<8x128xf32>
    %c127_i32 = arith.constant 127 : i32
    %20 = tpu.dynamic_rotate %5 by %c127_i32 dim 1 : vector<8x128xf32>, i32 -> vector<8x128xf32>
    %21 = vector.shape_cast %10 : vector<1x128xi1> to vector<1x128xi1>
    %22 = vector.broadcast %21 : vector<1x128xi1> to vector<8x128xi1>
    %23 = arith.select %22, %19, %20 : vector<8x128xi1>, vector<8x128xf32>
    %24 = arith.maximumf %5, %23 : vector<8x128xf32>
    %c2_i32_9 = arith.constant 2 : i32
    %25 = tpu.dynamic_rotate %24 by %c2_i32_9 dim 1 : vector<8x128xf32>, i32 -> vector<8x128xf32>
    %c126_i32 = arith.constant 126 : i32
    %26 = tpu.dynamic_rotate %24 by %c126_i32 dim 1 : vector<8x128xf32>, i32 -> vector<8x128xf32>
    %27 = vector.shape_cast %14 : vector<1x128xi1> to vector<1x128xi1>
    %28 = vector.broadcast %27 : vector<1x128xi1> to vector<8x128xi1>
    %29 = arith.select %28, %25, %26 : vector<8x128xi1>, vector<8x128xf32>
    %30 = arith.maximumf %24, %29 : vector<8x128xf32>
    %c4_i32_10 = arith.constant 4 : i32
    %31 = tpu.dynamic_rotate %30 by %c4_i32_10 dim 1 : vector<8x128xf32>, i32 -> vector<8x128xf32>
    %c124_i32 = arith.constant 124 : i32
    %32 = tpu.dynamic_rotate %30 by %c124_i32 dim 1 : vector<8x128xf32>, i32 -> vector<8x128xf32>
    %33 = vector.shape_cast %18 : vector<1x128xi1> to vector<1x128xi1>
    %34 = vector.broadcast %33 : vector<1x128xi1> to vector<8x128xi1>
    %35 = arith.select %34, %31, %32 : vector<8x128xi1>, vector<8x128xf32>
    %36 = arith.maximumf %30, %35 : vector<8x128xf32>
    %37 = arith.subf %5, %36 : vector<8x128xf32>
    %38 = math.exp %37 : vector<8x128xf32>
    %c1_i32_11 = arith.constant 1 : i32
    %39 = tpu.dynamic_rotate %38 by %c1_i32_11 dim 1 : vector<8x128xf32>, i32 -> vector<8x128xf32>
    %c127_i32_12 = arith.constant 127 : i32
    %40 = tpu.dynamic_rotate %38 by %c127_i32_12 dim 1 : vector<8x128xf32>, i32 -> vector<8x128xf32>
    %41 = vector.shape_cast %10 : vector<1x128xi1> to vector<1x128xi1>
    %42 = vector.broadcast %41 : vector<1x128xi1> to vector<8x128xi1>
    %43 = arith.select %42, %39, %40 : vector<8x128xi1>, vector<8x128xf32>
    %44 = arith.addf %38, %43 : vector<8x128xf32>
    %c2_i32_13 = arith.constant 2 : i32
    %45 = tpu.dynamic_rotate %44 by %c2_i32_13 dim 1 : vector<8x128xf32>, i32 -> vector<8x128xf32>
    %c126_i32_14 = arith.constant 126 : i32
    %46 = tpu.dynamic_rotate %44 by %c126_i32_14 dim 1 : vector<8x128xf32>, i32 -> vector<8x128xf32>
    %47 = vector.shape_cast %14 : vector<1x128xi1> to vector<1x128xi1>
    %48 = vector.broadcast %47 : vector<1x128xi1> to vector<8x128xi1>
    %49 = arith.select %48, %45, %46 : vector<8x128xi1>, vector<8x128xf32>
    %50 = arith.addf %44, %49 : vector<8x128xf32>
    %c4_i32_15 = arith.constant 4 : i32
    %51 = tpu.dynamic_rotate %50 by %c4_i32_15 dim 1 : vector<8x128xf32>, i32 -> vector<8x128xf32>
    %c124_i32_16 = arith.constant 124 : i32
    %52 = tpu.dynamic_rotate %50 by %c124_i32_16 dim 1 : vector<8x128xf32>, i32 -> vector<8x128xf32>
    %53 = vector.shape_cast %18 : vector<1x128xi1> to vector<1x128xi1>
    %54 = vector.broadcast %53 : vector<1x128xi1> to vector<8x128xi1>
    %55 = arith.select %54, %51, %52 : vector<8x128xi1>, vector<8x128xf32>
    %56 = arith.addf %50, %55 : vector<8x128xf32>
    %57 = tpu.reciprocal %56 : vector<8x128xf32> -> vector<8x128xf32>
    %58 = arith.mulf %38, %57 : vector<8x128xf32>
    %c0_17 = arith.constant 0 : index
    %c0_18 = arith.constant 0 : index
    %59 = vector.load %arg4[%c0_17, %c0_18] : memref<8x128xf32, #tpu.memory_space<vmem>>, vector<8x128xf32>
    tpu.vector_store %arg4[%c0_17, %c0_18], %58 {strides = array<i32>} : memref<8x128xf32, #tpu.memory_space<vmem>>, vector<8x128xf32>,
    return
  }
  func.func @transform_0(%arg0: i32) -> (i32, i32) {
    %c0_i32 = arith.constant 0 : i32
    %c0_i32_0 = arith.constant 0 : i32
    return %arg0, %c0_i32 : i32, i32
  }
  func.func @transform_1(%arg0: i32) -> (i32, i32) {
    %c0_i32 = arith.constant 0 : i32
    %c0_i32_0 = arith.constant 0 : i32
    %c0_i32_1 = arith.constant 0 : i32
    return %c0_i32, %c0_i32_0 : i32, i32
  }
  func.func @transform_2(%arg0: i32) -> (i32, i32) {
    %c0_i32 = arith.constant 0 : i32
    %c0_i32_0 = arith.constant 0 : i32
    %c0_i32_1 = arith.constant 0 : i32
    return %c0_i32, %c0_i32_0 : i32, i32
  }
  func.func @transform_3(%arg0: i32) -> (i32, i32) {
    %c0_i32 = arith.constant 0 : i32
    %c0_i32_0 = arith.constant 0 : i32
    return %arg0, %c0_i32 : i32, i32
  }
}

</mosaic_0001>

<llo_original>
// kernel: tpu_custom_call.1
$region0: #{tpu_custom_call.1}
  #allocation0 [shape = 'u32[]', space=smem, size = 0x4, offset = 0x4, fixed_abs, tag = 'smem constant byte address 0x4 - core index']
  #allocation1 [shape = 'u32[144,128]{1,0:T(1,128)}', space=vmem, size = 0x12000, scoped, tag = 'internal scratch']
  %s0 = inlined_call_operand.hbm [shape: f32[8,256], index: 0, kind: input, shape index: {}]
  %s1 = inlined_call_operand.hbm [shape: f32[256,128], index: 1, kind: input, shape index: {}]
  %s2 = inlined_call_operand.vmem [shape: f32[1,128], index: 2, kind: input, shape index: {}]
  %s3 = inlined_call_operand.hbm [shape: f32[8,128], index: 3, kind: output, shape index: {}]
  %s4 = sld [smem:[#allocation0]]
  $region30: #{tpu_custom_call.1} parent=0
    _
  %s6 = ssub.s32 1, %s4
  %s7 = scalar_select 0, %s6, %s4
  $region1: #{tpu_custom_call.1} parent=0
    #allocation2 [shape = 'u8[8192]{0}', space=vmem, size = 0x2000, scoped, tag = 'input window, operand 0, single buffered']
    #allocation3 [shape = 's32[1]{0}', space=sflag, size = 0x4, scoped, tag = 'scoped memory for tpu_custom_call.1']
    #allocation4 [shape = 's32[1]{0}', space=sflag, size = 0x4, scoped, tag = 'scoped memory for tpu_custom_call.1']
    #allocation5 [shape = 'u8[131072]{0}', space=vmem, size = 0x20000, scoped, tag = 'input window, operand 1, single buffered']
    #allocation6 [shape = 's32[1]{0}', space=sflag, size = 0x4, scoped, tag = 'scoped memory for tpu_custom_call.1']
    #allocation7 [shape = 'u8[4096]{0}', space=vmem, size = 0x1000, scoped, tag = 'output window, operand 0, single buffered']
    %8 = vsyncpa [#allocation3], 0
    %9 = vsyncpa [#allocation6], 0
    %10 = vsyncpa [#allocation4], 0
    // Predicated region
    $region2: #{tpu_custom_call.1} parent=1 // pred_check
      _
    $region3: #{tpu_custom_call.1} parent=1 // pred_check_branch
      %12 = sbr.rel (0) target = $region5
    $region4: #{tpu_custom_call.1} parent=1 // pred_region
      %s14 = ssub.s32 256, 256
      %15 = vsyncadd [#allocation3], %s14
      %s17 = sshll.u32 [#allocation2], 4
      %s18 = int_to_ptr.vmem [resolvable:$true] %s17
      %20 = dma.hbm_to_vmem [thread:$0]  %s0, 256, %s18, [#allocation3]
    $region5: #{tpu_custom_call.1} parent=1 // pred_fallthru
      _
    // Predicated region
    $region6: #{tpu_custom_call.1} parent=1 // pred_check
      _
    $region7: #{tpu_custom_call.1} parent=1 // pred_check_branch
      %22 = sbr.rel (0) target = $region9
    $region8: #{tpu_custom_call.1} parent=1 // pred_region
      %s24 = ssub.s32 4096, 4096
      %25 = vsyncadd [#allocation6], %s24
      %s26 = sshll.u32 [#allocation5], 4
      %s27 = int_to_ptr.vmem [resolvable:$true] %s26
      %32 = dma.hbm_to_vmem [thread:$0]  %s1, 4096, %s27, [#allocation6], 128, 128, 8
    $region9: #{tpu_custom_call.1} parent=1 // pred_fallthru
      _
    // Predicated region
    $region10: #{tpu_custom_call.1} parent=1 // pred_check
      _
    $region11: #{tpu_custom_call.1} parent=1 // pred_check_branch
      %34 = sbr.rel (0) target = $region13
    $region12: #{tpu_custom_call.1} parent=1 // pred_region
      _
    $region13: #{tpu_custom_call.1} parent=1 // pred_fallthru
      _
    // Predicated region
    $region14: #{tpu_custom_call.1} parent=1 // pred_check
      _
    $region15: #{tpu_custom_call.1} parent=1 // pred_check_branch
      %36 = sbr.rel (0) target = $region17
    $region16: #{tpu_custom_call.1} parent=1 // pred_region
      %37 = dma.done [#allocation3], 256
    $region17: #{tpu_custom_call.1} parent=1 // pred_fallthru
      _
    // Predicated region
    $region18: #{tpu_custom_call.1} parent=1 // pred_check
      _
    $region19: #{tpu_custom_call.1} parent=1 // pred_check_branch
      %39 = sbr.rel (0) target = $region21
    $region20: #{tpu_custom_call.1} parent=1 // pred_region
      %40 = dma.done [#allocation6], 4096
    $region21: #{tpu_custom_call.1} parent=1 // pred_fallthru
      _
    %v41 = vld [vmem:[#allocation2] sm:$0xff]
    %v42 = vld [vmem:[#allocation2 + $0x8] sm:$0xff]
    %v43 = vld [vmem:[#allocation5] sm:$0xff]
    %v44 = vld [vmem:[#allocation5 + $0x8] sm:$0xff]
    %v45 = vld [vmem:[#allocation5 + $0x10] sm:$0xff]
    %v46 = vld [vmem:[#allocation5 + $0x18] sm:$0xff]
    %v47 = vld [vmem:[#allocation5 + $0x20] sm:$0xff]
    %v48 = vld [vmem:[#allocation5 + $0x28] sm:$0xff]
    %v49 = vld [vmem:[#allocation5 + $0x30] sm:$0xff]
    %v50 = vld [vmem:[#allocation5 + $0x38] sm:$0xff]
    %v51 = vld [vmem:[#allocation5 + $0x40] sm:$0xff]
    %v52 = vld [vmem:[#allocation5 + $0x48] sm:$0xff]
    %v53 = vld [vmem:[#allocation5 + $0x50] sm:$0xff]
    %v54 = vld [vmem:[#allocation5 + $0x58] sm:$0xff]
    %v55 = vld [vmem:[#allocation5 + $0x60] sm:$0xff]
    %v56 = vld [vmem:[#allocation5 + $0x68] sm:$0xff]
    %v57 = vld [vmem:[#allocation5 + $0x70] sm:$0xff]
    %v58 = vld [vmem:[#allocation5 + $0x78] sm:$0xff]
    %v59 = vld [vmem:[#allocation5 + $0x80] sm:$0xff]
    %v60 = vld [vmem:[#allocation5 + $0x88] sm:$0xff]
    %v61 = vld [vmem:[#allocation5 + $0x90] sm:$0xff]
    %v62 = vld [vmem:[#allocation5 + $0x98] sm:$0xff]
    %v63 = vld [vmem:[#allocation5 + $0xa0] sm:$0xff]
    %v64 = vld [vmem:[#allocation5 + $0xa8] sm:$0xff]
    %v65 = vld [vmem:[#allocation5 + $0xb0] sm:$0xff]
    %v66 = vld [vmem:[#allocation5 + $0xb8] sm:$0xff]
    %v67 = vld [vmem:[#allocation5 + $0xc0] sm:$0xff]
    %v68 = vld [vmem:[#allocation5 + $0xc8] sm:$0xff]
    %v69 = vld [vmem:[#allocation5 + $0xd0] sm:$0xff]
    %v70 = vld [vmem:[#allocation5 + $0xd8] sm:$0xff]
    %v71 = vld [vmem:[#allocation5 + $0xe0] sm:$0xff]
    %v72 = vld [vmem:[#allocation5 + $0xe8] sm:$0xff]
    %v73 = vld [vmem:[#allocation5 + $0xf0] sm:$0xff]
    %v74 = vld [vmem:[#allocation5 + $0xf8] sm:$0xff]
    %v75 = vld [vmem:[%s2] sm:$0x1]
    %v77 = vlaneseq
    %v78 = vshrl.u32 %v77, 7
    %v79 = vsub.s32 0, %v78
    %v80 = vrot.slane %v75, %v79
    %82 = vmatprep.subr.mxu0 0.0
    %83 = vmatpush1.msra.mxu0 %v43
    %84 = vmatprep.subr.mxu0 0.0
    %85 = vmatpush1.msra.mxu0 %v44
    %86 = vmatprep.subr.mxu0 0.0
    %87 = vmatpush1.msra.mxu0 %v45
    %88 = vmatprep.subr.mxu0 0.0
    %89 = vmatpush1.msra.mxu0 %v46
    %90 = vmatprep.subr.mxu0 0.0
    %91 = vmatpush1.msra.mxu0 %v47
    %92 = vmatprep.subr.mxu0 0.0
    %93 = vmatpush1.msra.mxu0 %v48
    %94 = vmatprep.subr.mxu0 0.0
    %95 = vmatpush1.msra.mxu0 %v49
    %96 = vmatprep.subr.mxu0 0.0
    %97 = vmatpush1.msra.mxu0 %v50
    %98 = vmatprep.subr.mxu0 0.0
    %99 = vmatpush1.msra.mxu0 %v51
    %100 = vmatprep.subr.mxu0 0.0
    %101 = vmatpush1.msra.mxu0 %v52
    %102 = vmatprep.subr.mxu0 0.0
    %103 = vmatpush1.msra.mxu0 %v53
    %104 = vmatprep.subr.mxu0 0.0
    %105 = vmatpush1.msra.mxu0 %v54
    %106 = vmatprep.subr.mxu0 0.0
    %107 = vmatpush1.msra.mxu0 %v55
    %108 = vmatprep.subr.mxu0 0.0
    %109 = vmatpush1.msra.mxu0 %v56
    %110 = vmatprep.subr.mxu0 0.0
    %111 = vmatpush1.msra.mxu0 %v57
    %112 = vmatprep.subr.mxu0 0.0
    %113 = vmatpush1.msra.mxu0 %v58
    %114 = vmatprep.subr.mxu0 0.0
    %115 = vmatpush1.msra.mxu0 %v59
    %116 = vmatprep.subr.mxu0 0.0
    %117 = vmatpush1.msra.mxu0 %v60
    %118 = vmatprep.subr.mxu0 0.0
    %119 = vmatpush1.msra.mxu0 %v61
    %120 = vmatprep.subr.mxu0 0.0
    %121 = vmatpush1.msra.mxu0 %v62
    %122 = vmatprep.subr.mxu0 0.0
    %123 = vmatpush1.msra.mxu0 %v63
    %124 = vmatprep.subr.mxu0 0.0
    %125 = vmatpush1.msra.mxu0 %v64
    %126 = vmatprep.subr.mxu0 0.0
    %127 = vmatpush1.msra.mxu0 %v65
    %128 = vmatprep.subr.mxu0 0.0
    %129 = vmatpush1.msra.mxu0 %v66
    %130 = vmatprep.subr.mxu0 0.0
    %131 = vmatpush1.msra.mxu0 %v67
    %132 = vmatprep.subr.mxu0 0.0
    %133 = vmatpush1.msra.mxu0 %v68
    %134 = vmatprep.subr.mxu0 0.0
    %135 = vmatpush1.msra.mxu0 %v69
    %136 = vmatprep.subr.mxu0 0.0
    %137 = vmatpush1.msra.mxu0 %v70
    %138 = vmatprep.subr.mxu0 0.0
    %139 = vmatpush1.msra.mxu0 %v71
    %140 = vmatprep.subr.mxu0 0.0
    %141 = vmatpush1.msra.mxu0 %v72
    %142 = vmatprep.subr.mxu0 0.0
    %143 = vmatpush1.msra.mxu0 %v73
    %144 = vmatprep.subr.mxu0 0.0
    %145 = vmatpush1.msra.mxu0 %v74
    %146 = vmatprep.mubr.f32.mxu0 %v42
    %147 = vmatmul.mubr.f32.gmra.mrb[0].mxu0 %v41
    %v148 = vpop.f32.mrb[0].mxu0
    %v149 = vadd.f32 %v80, %v148
    %v150 = vpop.f32.mrb[0].mxu0
    %151 = vdwg.mxu0
    %v152 = vlaneseq
    %v153 = vand.u32 %v152, 127
    %154 = vrot.lane.b32.xlu0 %v153, 1
    %v155 = vpop.permute.xlu0 %154
    %v156 = vxor.u32 %v153, 1
    %vm157 = vcmp.eq.s32.totalorder %v155, %v156
    %158 = vrot.lane.b32.xlu0 %v153, 2
    %v159 = vpop.permute.xlu0 %158
    %v160 = vxor.u32 %v153, 2
    %vm161 = vcmp.eq.s32.totalorder %v159, %v160
    %162 = vrot.lane.b32.xlu0 %v153, 4
    %v163 = vpop.permute.xlu0 %162
    %v164 = vxor.u32 %v153, 4
    %vm165 = vcmp.eq.s32.totalorder %v163, %v164
    %166 = vrot.lane.b32.xlu0 %v149, 1
    %v167 = vpop.permute.xlu0 %166
    %168 = vrot.lane.b32.xlu0 %v149, 127
    %v169 = vpop.permute.xlu0 %168
    %v170 = vsel %vm157, 1, 0
    %v171 = vlaneseq
    %v172 = vshrl.u32 %v171, 7
    %v173 = vsub.s32 0, %v172
    %v174 = vrot.slane %v170, %v173
    %vm175 = vcmp.eq.s32.totalorder %v174, 1
    %v176 = vsel %vm175, %v167, %v169
    %v177 = vmax.f32 %v149, %v176
    %178 = vrot.lane.b32.xlu0 %v177, 2
    %v179 = vpop.permute.xlu0 %178
    %180 = vrot.lane.b32.xlu0 %v177, 126
    %v181 = vpop.permute.xlu0 %180
    %v182 = vsel %vm161, 1, 0
    %v183 = vlaneseq
    %v184 = vshrl.u32 %v183, 7
    %v185 = vsub.s32 0, %v184
    %v186 = vrot.slane %v182, %v185
    %vm187 = vcmp.eq.s32.totalorder %v186, 1
    %v188 = vsel %vm187, %v179, %v181
    %v189 = vmax.f32 %v177, %v188
    %190 = vrot.lane.b32.xlu0 %v189, 4
    %v191 = vpop.permute.xlu0 %190
    %192 = vrot.lane.b32.xlu0 %v189, 124
    %v193 = vpop.permute.xlu0 %192
    %v194 = vsel %vm165, 1, 0
    %v195 = vlaneseq
    %v196 = vshrl.u32 %v195, 7
    %v197 = vsub.s32 0, %v196
    %v198 = vrot.slane %v194, %v197
    %vm199 = vcmp.eq.s32.totalorder %v198, 1
    %v200 = vsel %vm199, %v191, %v193
    %v201 = vmax.f32 %v189, %v200
    %v202 = vsub.f32 %v149, %v201
    %v203 = vmul.f32 %v202, 1.442695
    %v204 = vpow.pop %v203
    %205 = vrot.lane.b32.xlu0 %v204, 1
    %v206 = vpop.permute.xlu0 %205
    %207 = vrot.lane.b32.xlu0 %v204, 127
    %v208 = vpop.permute.xlu0 %207
    %v209 = vsel %vm175, %v206, %v208
    %v210 = vadd.f32 %v204, %v209
    %211 = vrot.lane.b32.xlu0 %v210, 2
    %v212 = vpop.permute.xlu0 %211
    %213 = vrot.lane.b32.xlu0 %v210, 126
    %v214 = vpop.permute.xlu0 %213
    %v215 = vsel %vm187, %v212, %v214
    %v216 = vadd.f32 %v210, %v215
    %217 = vrot.lane.b32.xlu0 %v216, 4
    %v218 = vpop.permute.xlu0 %217
    %219 = vrot.lane.b32.xlu0 %v216, 124
    %v220 = vpop.permute.xlu0 %219
    %v221 = vsel %vm199, %v218, %v220
    %v222 = vadd.f32 %v216, %v221
    %v223 = vrcp.pop %v222
    %v224 = vmul.f32 %v204, %v223
    %225 = vst [vmem:[#allocation7] sm:$0xff] %v224
    // Predicated region
    $region22: #{tpu_custom_call.1} parent=1 // pred_check
      _
    $region23: #{tpu_custom_call.1} parent=1 // pred_check_branch
      %227 = sbr.rel (0) target = $region25
    $region24: #{tpu_custom_call.1} parent=1 // pred_region
      %s229 = ssub.s32 128, 128
      %230 = vsyncadd [#allocation4], %s229
      %s232 = sshll.u32 [#allocation7], 4
      %s233 = int_to_ptr.vmem [resolvable:$true] %s232
      %235 = dma.vmem_to_hbm [thread:$0]  %s233, 128, %s3, [#allocation4]
    $region25: #{tpu_custom_call.1} parent=1 // pred_fallthru
      _
    // Predicated region
    $region26: #{tpu_custom_call.1} parent=1 // pred_check
      _
    $region27: #{tpu_custom_call.1} parent=1 // pred_check_branch
      %237 = sbr.rel (0) target = $region29
    $region28: #{tpu_custom_call.1} parent=1 // pred_region
      %238 = dma.done [#allocation4], 128
    $region29: #{tpu_custom_call.1} parent=1 // pred_fallthru
      _
    %239 = vsyncpa [#allocation3], 1
    %240 = vsyncpa [#allocation6], 1
    %241 = vsyncpa [#allocation4], 1

</llo_original>
